<compile_context>
chip_gen: v5e
topology: v5e:2x2
jax: 0.10.0
libtpu: 0.0.40
codegen_flags: <defaults>
</compile_context>

<pallas_src>
import math
from functools import partial

import jax
import jax.numpy as jnp
import numpy as np
from jax.experimental import pallas as pl
from jax.experimental.pallas import tpu as pltpu

NORM_V = 200.0
NORM_D = 2000.0
N_ANG = 64
N_POINTS = 64
HIDDEN = 128
N_OUT = 8
XIN = 64                         # obs(50) + cos(lang)(4) + sin(lang)(4) + pad(6)
R0_W = 256 + 4 * 256             # [lx|ly](128) + h0(128) + 4*(cc(128)+ss(128)) = 1280
KBIG = 5 * 128                   # [lnorm|0] + 4*[cos_i|sin_i] = 640


# --------------------------------------------------------------------------
# Pallas kernel: full Actor_v3 forward for one batch tile.
# --------------------------------------------------------------------------
def _actor_kernel(xin_ref, win_ref, bin_ref, wbig_ref, wm1_ref, bm1_ref,
                  wf_ref, bf_ref, out_ref):
    f32 = jnp.float32
    bf16 = jnp.bfloat16
    x = xin_ref[...]                                         # [BT, 64] f32

    # Fused input matmul (kept f32 — feeds the trig identities):
    #   lanes   0:128   -> [lx | ly]
    #   lanes 128:256   -> h0 = lautre @ W0[:, :10].T + b0
    #   lanes 256+256i : 384+256i -> cos(lang_i) replicated across 128 lanes
    #   lanes 384+256i : 512+256i -> [ sin(lang_i) x64 | -sin(lang_i) x64 ]
    r0 = jnp.dot(x, win_ref[...], preferred_element_type=f32) + bin_ref[...]

    xy = r0[:, 0:128]                                        # [lx | ly]
    h0 = r0[:, 128:256]                                      # [BT, 128] f32 (exact)

    yx = pltpu.roll(xy, shift=64, axis=1)                    # [ly | lx]  (one XLU roll)
    r2 = xy * xy + yx * yx                                   # [r^2 | r^2] (duplicated)
    pos = r2 > 1e-30                                         # near-zero guard
    inv_r = jax.lax.rsqrt(jnp.where(pos, r2, 1.0))           # EUP
    lnorm = r2 * inv_r                                       # [|r| | |r|], ~0 when tiny
    lane = jax.lax.broadcasted_iota(jnp.int32, xy.shape, 1)
    cs0 = (lane < 64).astype(f32)                            # atan2(0,0)=0 convention
    cs = jnp.where(pos, xy * inv_r, cs0)                     # [cos_a | sin_a]
    sc = jnp.where(pos, yx * inv_r, 1.0 - cs0)               # [sin_a | cos_a]

    # Per-pod rotated-angle pairs: [cos(ang-lang_i) | sin(ang-lang_i)], 128 lanes,
    # built from MXU-broadcast cos(lang_i)/sin(lang_i) lanes (no XLU broadcasts).
    pairs = []
    for i in range(4):
        base = 256 + 256 * i
        cc = r0[:, base:base + 128]                          # [ci | ci]
        ss = r0[:, base + 128:base + 256]                    # [si | -si]
        pairs.append(cs * cc + sc * ss)

    # All blocks are 128-wide and 128-aligned -> concat is free vreg placement.
    feat = jnp.concatenate([lnorm] + pairs, axis=-1).astype(bf16)   # [BT, 640]

    h = h0 + jnp.dot(feat, wbig_ref[...], preferred_element_type=f32)
    h = jnp.where(h > 0, h, 0.01 * h)                        # leaky_relu
    h = jnp.dot(h.astype(bf16), wm1_ref[...], preferred_element_type=f32) + bm1_ref[...]
    h = jnp.where(h > 0, h, 0.01 * h)                        # leaky_relu
    logits = jnp.dot(h.astype(bf16), wf_ref[...], preferred_element_type=f32) + bf_ref[...]
    # Exact sigmoid via one tanh (single EUP push), on the 8 real lanes only.
    out_ref[...] = 0.5 * jnp.tanh(0.5 * logits[:, :N_OUT]) + 0.5


# --------------------------------------------------------------------------
# Parameter init (deterministic, mimics torch.nn.Linear default init).
# --------------------------------------------------------------------------
def _linear_init(key, out_f, in_f):
    kw, kb = jax.random.split(key)
    bound = 1.0 / math.sqrt(in_f)
    w = jax.random.uniform(kw, (out_f, in_f), jnp.float32, -bound, bound)
    b = jax.random.uniform(kb, (out_f,), jnp.float32, -bound, bound)
    return w, b


def init_params(key):
    k1, k2, k3, k4 = jax.random.split(key, 4)
    W1, b1 = _linear_init(k1, N_POINTS, 14 * 4 + 4)          # combinaison_points [64, 60]
    W0, b0 = _linear_init(k2, HIDDEN, 10 + N_POINTS + 2 * (N_ANG * 4))  # [128, 586]
    Wm1, bm1 = _linear_init(k3, HIDDEN, HIDDEN)              # finalMLP[1]        [128, 128]
    Wf, bf = _linear_init(k4, N_OUT, HIDDEN)                 # final_layer        [8, 128]
    return (W1, b1, W0, b0, Wm1, bm1, Wf, bf)


# --------------------------------------------------------------------------
# One-time weight folding (call once, cache the result).
# --------------------------------------------------------------------------
def fold_params(params):
    W1, b1, W0, b0, Wm1, bm1, Wf, bf = params

    # combinaison_points folding: per-obs-column weights (normalisations folded).
    W1t = W1.T                                               # [60, 64]
    blks = [W1t[14 * i:14 * i + 14] for i in range(4)]
    w_sum = blks[0] + blks[1] + blks[2] + blks[3]
    colsum = jnp.stack([b.sum(axis=0) for b in blks], axis=0)          # [4, 64]
    wpx = (w_sum[:4] - colsum) / NORM_D
    wax = w_sum[4:] / NORM_D
    wvx = W1t[56:60] / NORM_V

    W0t = W0.T                                               # [586, 128]

    # Fused input matmul weight: xin [*, 64] @ W_in [64, 1280]  (stays f32).
    W_in = jnp.zeros((XIN, R0_W), jnp.float32)
    W_in = W_in.at[0:4, 0:64].set(wpx)
    W_in = W_in.at[4:8, 0:64].set(wvx)
    W_in = W_in.at[8:18, 0:64].set(wax)
    W_in = W_in.at[18:22, 64:128].set(wpx)
    W_in = W_in.at[22:26, 64:128].set(wvx)
    W_in = W_in.at[26:36, 64:128].set(wax)
    W_in = W_in.at[40:50, 128:256].set(W0t[0:10])            # lautre partial of h
    for i in range(4):
        base = 256 + 256 * i
        W_in = W_in.at[50 + i, base:base + 128].set(1.0)     # cos(lang_i) broadcast
        W_in = W_in.at[54 + i, base + 128:base + 192].set(1.0)   # +sin(lang_i)
        W_in = W_in.at[54 + i, base + 192:base + 256].set(-1.0)  # -sin(lang_i)
    b_in = (jnp.zeros((1, R0_W), jnp.float32)
            .at[0, 0:64].set(b1).at[0, 64:128].set(b1).at[0, 128:256].set(b0))

    # Big matmul weight, K = 640: rows [lnorm(64), zeros(64), (cos_i, sin_i)*4].
    W_big = jnp.zeros((KBIG, HIDDEN), jnp.float32)
    W_big = W_big.at[0:64, :].set(W0t[10:74])
    for i in range(4):
        W_big = W_big.at[128 + 128 * i:192 + 128 * i, :].set(W0t[74 + 64 * i:138 + 64 * i])
        W_big = W_big.at[192 + 128 * i:256 + 128 * i, :].set(W0t[330 + 64 * i:394 + 64 * i])

    W_m1 = Wm1.T                                             # [128, 128]
    b_m1 = bm1.reshape(1, HIDDEN)
    # Final layer padded to 128 lanes for the matmul; the kernel slices [:, :8].
    W_f = jnp.zeros((HIDDEN, HIDDEN), jnp.float32).at[:, 0:N_OUT].set(Wf.T)
    b_f = jnp.zeros((1, HIDDEN), jnp.float32).at[0, 0:N_OUT].set(bf)

    return (W_in, b_in,
            W_big.astype(jnp.bfloat16),
            W_m1.astype(jnp.bfloat16), b_m1,
            W_f.astype(jnp.bfloat16), b_f)


# --------------------------------------------------------------------------
# Generation-aware batch-tile choice.
# --------------------------------------------------------------------------
def _num_tensorcores():
    try:
        kind = jax.devices()[0].device_kind.lower()
    except Exception:
        return 1
    return 2 if "v7" in kind else 1


def _choose_bt(B, n_cores):
    round8 = lambda n: max(8, ((n + 7) // 8) * 8)
    if n_cores <= 1:
        # Single TensorCore (v5e/v6e): one big tile, no extra grid-step overhead.
        return min(512, round8(B))
    # Dual-TC (v7x): even number of grid steps >= 2 so both cores get equal work.
    steps = -(-B // 512)
    steps = max(2, steps + (steps & 1))
    return min(512, round8(-(-B // steps)))


# --------------------------------------------------------------------------
# Wrapper: glue (xin assembly / padding) + pallas_call.
# --------------------------------------------------------------------------
@partial(jax.jit, static_argnames=("bt",))
def _forward_impl(obs, folded, bt):
    W_in, b_in, W_big, W_m1, b_m1, W_f, b_f = folded
    B = obs.shape[0]
    b_pad = ((B + bt - 1) // bt) * bt

    obs = obs.astype(jnp.float32)
    lang = obs[:, 36:40]
    xin = jnp.concatenate(
        [obs, jnp.cos(lang), jnp.sin(lang), jnp.zeros((B, XIN - 58), jnp.float32)], axis=1)
    xin = jnp.pad(xin, ((0, b_pad - B), (0, 0)))

    const = lambda i: (0, 0)
    in_specs = [
        pl.BlockSpec((bt, XIN), lambda i: (i, 0)),           # xin
        pl.BlockSpec((XIN, R0_W), const),                    # W_in   (f32)
        pl.BlockSpec((1, R0_W), const),                      # b_in
        pl.BlockSpec((KBIG, HIDDEN), const),                 # W_big  (bf16)
        pl.BlockSpec((HIDDEN, HIDDEN), const),               # W_m1   (bf16)
        pl.BlockSpec((1, HIDDEN), const),                    # b_m1
        pl.BlockSpec((HIDDEN, HIDDEN), const),               # W_f    (bf16, lane-padded)
        pl.BlockSpec((1, HIDDEN), const),                    # b_f
    ]
    out_specs = pl.BlockSpec((bt, N_OUT), lambda i: (i, 0))  # 8-lane output, no padding

    out = pl.pallas_call(
        _actor_kernel,
        out_shape=jax.ShapeDtypeStruct((b_pad, N_OUT), jnp.float32),
        grid_spec=pltpu.PrefetchScalarGridSpec(
            num_scalar_prefetch=0,
            grid=(b_pad // bt,),
            in_specs=in_specs,
            out_specs=out_specs,
        ),
        compiler_params=pltpu.CompilerParams(
            dimension_semantics=("parallel",),
            vmem_limit_bytes=32 * 1024 * 1024),
    )(xin, W_in, b_in, W_big, W_m1, b_m1, W_f, b_f)

    return out[:B]


def actor_v3_forward(obs, folded_params, *, bt=None):
    assert obs.shape[1] == 50, obs.shape
    if bt is None:
        bt = _choose_bt(obs.shape[0], _num_tensorcores())
    return _forward_impl(obs, folded_params, bt)


# --------------------------------------------------------------------------
# Pure-JAX reference (direct transcription of the PyTorch forward, f32).
# --------------------------------------------------------------------------
def actor_v3_reference(obs, params):
    W1, b1, W0, b0, Wm1, bm1, Wf, bf = params
    x_pods, vx, x_autre = obs[:, :4], obs[:, 4:8], obs[:, 8:18]
    y_pods, vy, y_autre = obs[:, 18:22], obs[:, 22:26], obs[:, 26:36]
    lang, lautre = obs[:, 36:40], obs[:, 40:50]
    x_tot = jnp.concatenate([x_pods, x_autre], axis=1)
    y_tot = jnp.concatenate([y_pods, y_autre], axis=1)
    lx = jnp.concatenate(
        [(x_tot - x_pods[:, i:i + 1]) / NORM_D for i in range(4)] + [vx / NORM_V], axis=1)
    ly = jnp.concatenate(
        [(y_tot - y_pods[:, i:i + 1]) / NORM_D for i in range(4)] + [vy / NORM_V], axis=1)
    lx = lx @ W1.T + b1
    ly = ly @ W1.T + b1
    ang = jnp.arctan2(ly, lx)
    angs = jnp.concatenate([ang - lang[:, i:i + 1] for i in range(4)], axis=1)
    lcos, lsin = jnp.cos(angs), jnp.sin(angs)
    lnorm = jnp.sqrt(lx * lx + ly * ly)
    x = jnp.concatenate([lautre, lnorm, lcos, lsin], axis=1)
    x = jax.nn.leaky_relu(x @ W0.T + b0, 0.01)
    x = jax.nn.leaky_relu(x @ Wm1.T + bm1, 0.01)
    return jax.nn.sigmoid(x @ Wf.T + bf)


if __name__ == "__main__":
    key = jax.random.PRNGKey(0)
    k_obs, k_obs2, k_par = jax.random.split(key, 3)
    params = init_params(k_par)
    folded = fold_params(params)   # weight folding hoisted out of the per-call path

    # Tolerance 5e-3: bf16 MXU operands (f32 accumulation) vs. a full-f32 reference.
    B = 4
    observation = jax.random.uniform(k_obs, (B, 50), jnp.float32, -1.0, 1.0)
    out = jax.block_until_ready(actor_v3_forward(observation, folded))
    assert out.shape == (B, N_OUT), out.shape
    ref = jax.block_until_ready(actor_v3_reference(observation, params))
    np.testing.assert_allclose(np.asarray(out), np.asarray(ref), atol=5e-3, rtol=5e-3)

    # Larger batch: single-tile path on 1-TC chips, 2-step grid on v7x.
    B2 = 300
    observation2 = jax.random.uniform(k_obs2, (B2, 50), jnp.float32, -1.0, 1.0)
    out2 = jax.block_until_ready(actor_v3_forward(observation2, folded))
    ref2 = jax.block_until_ready(actor_v3_reference(observation2, params))
    np.testing.assert_allclose(np.asarray(out2), np.asarray(ref2), atol=5e-3, rtol=5e-3)

    # Explicit small tile: exercises the multi-step grid + row-padding path.
    out3 = jax.block_until_ready(actor_v3_forward(observation2, folded, bt=128))
    np.testing.assert_allclose(np.asarray(out3), np.asarray(ref2), atol=5e-3, rtol=5e-3)

    print("KERNEL_OK")
</pallas_src>

<mosaic_0001>
module attributes {stable_mosaic.version = 11 : i64} {
  func.func @_actor_kernel(%arg0: i32, %arg1: memref<8x64xf32, #tpu.memory_space<vmem>>, %arg2: memref<64x1280xf32, #tpu.memory_space<vmem>>, %arg3: memref<1x1280xf32, #tpu.memory_space<vmem>>, %arg4: memref<640x128xbf16, #tpu.memory_space<vmem>>, %arg5: memref<128x128xbf16, #tpu.memory_space<vmem>>, %arg6: memref<1x128xf32, #tpu.memory_space<vmem>>, %arg7: memref<128x128xbf16, #tpu.memory_space<vmem>>, %arg8: memref<1x128xf32, #tpu.memory_space<vmem>>, %arg9: memref<8x8xf32, #tpu.memory_space<vmem>>) attributes {dimension_semantics = [#tpu.dimension_semantics<parallel>], iteration_bounds = array<i64: 1>, scalar_prefetch = 0 : i64, scratch_operands = 0 : i64, tpu.core_type = #tpu.core_type<tc>, window_params = [{transform_indices = @transform_0, window_bounds = array<i64: 8, 64>}, {pipeline_mode = #tpu.pipeline_mode<synchronous>, transform_indices = @transform_1, window_bounds = array<i64: 64, 1280>}, {pipeline_mode = #tpu.pipeline_mode<synchronous>, transform_indices = @transform_2, window_bounds = array<i64: 1, 1280>}, {pipeline_mode = #tpu.pipeline_mode<synchronous>, transform_indices = @transform_3, window_bounds = array<i64: 640, 128>}, {pipeline_mode = #tpu.pipeline_mode<synchronous>, transform_indices = @transform_4, window_bounds = array<i64: 128, 128>}, {pipeline_mode = #tpu.pipeline_mode<synchronous>, transform_indices = @transform_5, window_bounds = array<i64: 1, 128>}, {pipeline_mode = #tpu.pipeline_mode<synchronous>, transform_indices = @transform_6, window_bounds = array<i64: 128, 128>}, {pipeline_mode = #tpu.pipeline_mode<synchronous>, transform_indices = @transform_7, window_bounds = array<i64: 1, 128>}, {transform_indices = @transform_8, window_bounds = array<i64: 8, 8>}]} {
    %c0 = arith.constant 0 : index
    %c0_0 = arith.constant 0 : index
    %0 = vector.load %arg1[%c0, %c0_0] : memref<8x64xf32, #tpu.memory_space<vmem>>, vector<8x64xf32>
    %c0_1 = arith.constant 0 : index
    %c0_2 = arith.constant 0 : index
    %1 = vector.load %arg2[%c0_1, %c0_2] : memref<64x1280xf32, #tpu.memory_space<vmem>>, vector<64x1280xf32>
    %cst = arith.constant dense<0.000000e+00> : vector<8x1280xf32>
    %2 = tpu.matmul %0, %1, %cst {dimension_numbers = #tpu.dot_dimension_numbers<[1], [0], [0], [1], [0, 0, 1, 1], [], []>} : vector<8x64xf32>, vector<64x1280xf32>, vector<8x1280xf32> -> vector<8x1280xf32>
    %c0_3 = arith.constant 0 : index
    %c0_4 = arith.constant 0 : index
    %3 = vector.load %arg3[%c0_3, %c0_4] : memref<1x1280xf32, #tpu.memory_space<vmem>>, vector<1x1280xf32>
    %4 = vector.broadcast %3 : vector<1x1280xf32> to vector<8x1280xf32>
    %5 = arith.addf %2, %4 : vector<8x1280xf32>
    %6 = vector.extract_strided_slice %5 {offsets = [0, 0], sizes = [8, 128], strides = [1, 1]} : vector<8x1280xf32> to vector<8x128xf32>
    %7 = vector.extract_strided_slice %5 {offsets = [0, 128], sizes = [8, 128], strides = [1, 1]} : vector<8x1280xf32> to vector<8x128xf32>
    %c64_i32 = arith.constant 64 : i32
    %8 = tpu.dynamic_rotate %6 by %c64_i32 dim 1 : vector<8x128xf32>, i32 -> vector<8x128xf32>
    %9 = arith.mulf %6, %6 : vector<8x128xf32>
    %10 = arith.mulf %8, %8 : vector<8x128xf32>
    %11 = arith.addf %9, %10 : vector<8x128xf32>
    %cst_5 = arith.constant 1.000000e-30 : f32
    %12 = vector.broadcast %cst_5 : f32 to vector<8x128xf32>
    %13 = arith.cmpf ogt, %11, %12 : vector<8x128xf32>
    %cst_6 = arith.constant 1.000000e+00 : f32
    %14 = vector.broadcast %cst_6 : f32 to vector<8x128xf32>
    %15 = arith.select %13, %11, %14 : vector<8x128xi1>, vector<8x128xf32>
    %16 = math.rsqrt %15 : vector<8x128xf32>
    %17 = arith.mulf %11, %16 : vector<8x128xf32>
    %18 = tpu.iota {dimensions = array<i32: 1>} : vector<8x128xi32>
    %c64_i32_7 = arith.constant 64 : i32
    %19 = vector.broadcast %c64_i32_7 : i32 to vector<8x128xi32>
    %20 = arith.cmpi slt, %18, %19 : vector<8x128xi32>
    %21 = arith.extui %20 : vector<8x128xi1> to vector<8x128xi32>
    %22 = arith.sitofp %21 : vector<8x128xi32> to vector<8x128xf32>
    %23 = arith.mulf %6, %16 : vector<8x128xf32>
    %24 = arith.select %13, %23, %22 : vector<8x128xi1>, vector<8x128xf32>
    %25 = arith.mulf %8, %16 : vector<8x128xf32>
    %cst_8 = arith.constant 1.000000e+00 : f32
    %26 = vector.broadcast %cst_8 : f32 to vector<8x128xf32>
    %27 = arith.subf %26, %22 : vector<8x128xf32>
    %28 = arith.select %13, %25, %27 : vector<8x128xi1>, vector<8x128xf32>
    %29 = vector.extract_strided_slice %5 {offsets = [0, 256], sizes = [8, 128], strides = [1, 1]} : vector<8x1280xf32> to vector<8x128xf32>
    %30 = vector.extract_strided_slice %5 {offsets = [0, 384], sizes = [8, 128], strides = [1, 1]} : vector<8x1280xf32> to vector<8x128xf32>
    %31 = arith.mulf %24, %29 : vector<8x128xf32>
    %32 = arith.mulf %28, %30 : vector<8x128xf32>
    %33 = arith.addf %31, %32 : vector<8x128xf32>
    %34 = vector.extract_strided_slice %5 {offsets = [0, 512], sizes = [8, 128], strides = [1, 1]} : vector<8x1280xf32> to vector<8x128xf32>
    %35 = vector.extract_strided_slice %5 {offsets = [0, 640], sizes = [8, 128], strides = [1, 1]} : vector<8x1280xf32> to vector<8x128xf32>
    %36 = arith.mulf %24, %34 : vector<8x128xf32>
    %37 = arith.mulf %28, %35 : vector<8x128xf32>
    %38 = arith.addf %36, %37 : vector<8x128xf32>
    %39 = vector.extract_strided_slice %5 {offsets = [0, 768], sizes = [8, 128], strides = [1, 1]} : vector<8x1280xf32> to vector<8x128xf32>
    %40 = vector.extract_strided_slice %5 {offsets = [0, 896], sizes = [8, 128], strides = [1, 1]} : vector<8x1280xf32> to vector<8x128xf32>
    %41 = arith.mulf %24, %39 : vector<8x128xf32>
    %42 = arith.mulf %28, %40 : vector<8x128xf32>
    %43 = arith.addf %41, %42 : vector<8x128xf32>
    %44 = vector.extract_strided_slice %5 {offsets = [0, 1024], sizes = [8, 128], strides = [1, 1]} : vector<8x1280xf32> to vector<8x128xf32>
    %45 = vector.extract_strided_slice %5 {offsets = [0, 1152], sizes = [8, 128], strides = [1, 1]} : vector<8x1280xf32> to vector<8x128xf32>
    %46 = arith.mulf %24, %44 : vector<8x128xf32>
    %47 = arith.mulf %28, %45 : vector<8x128xf32>
    %48 = arith.addf %46, %47 : vector<8x128xf32>
    %49 = tpu.concatenate %17, %33, %38, %43, %48 in 1 : vector<8x128xf32>, vector<8x128xf32>, vector<8x128xf32>, vector<8x128xf32>, vector<8x128xf32> -> vector<8x640xf32>
    %50 = arith.truncf %49 : vector<8x640xf32> to vector<8x640xbf16>
    %c0_9 = arith.constant 0 : index
    %c0_10 = arith.constant 0 : index
    %51 = vector.load %arg4[%c0_9, %c0_10] : memref<640x128xbf16, #tpu.memory_space<vmem>>, vector<640x128xbf16>
    %cst_11 = arith.constant dense<0.000000e+00> : vector<8x128xf32>
    %52 = tpu.matmul %50, %51, %cst_11 {dimension_numbers = #tpu.dot_dimension_numbers<[1], [0], [0], [1], [0, 0, 1, 1], [], []>} : vector<8x640xbf16>, vector<640x128xbf16>, vector<8x128xf32> -> vector<8x128xf32>
    %53 = arith.addf %7, %52 : vector<8x128xf32>
    %cst_12 = arith.constant 0.000000e+00 : f32
    %54 = vector.broadcast %cst_12 : f32 to vector<8x128xf32>
    %55 = arith.cmpf ogt, %53, %54 : vector<8x128xf32>
    %cst_13 = arith.constant 0.00999999977 : f32
    %56 = vector.broadcast %cst_13 : f32 to vector<8x128xf32>
    %57 = arith.mulf %56, %53 : vector<8x128xf32>
    %58 = arith.select %55, %53, %57 : vector<8x128xi1>, vector<8x128xf32>
    %59 = arith.truncf %58 : vector<8x128xf32> to vector<8x128xbf16>
    %c0_14 = arith.constant 0 : index
    %c0_15 = arith.constant 0 : index
    %60 = vector.load %arg5[%c0_14, %c0_15] : memref<128x128xbf16, #tpu.memory_space<vmem>>, vector<128x128xbf16>
    %cst_16 = arith.constant dense<0.000000e+00> : vector<8x128xf32>
    %61 = tpu.matmul %59, %60, %cst_16 {dimension_numbers = #tpu.dot_dimension_numbers<[1], [0], [0], [1], [0, 0, 1, 1], [], []>} : vector<8x128xbf16>, vector<128x128xbf16>, vector<8x128xf32> -> vector<8x128xf32>
    %c0_17 = arith.constant 0 : index
    %c0_18 = arith.constant 0 : index
    %62 = vector.load %arg6[%c0_17, %c0_18] : memref<1x128xf32, #tpu.memory_space<vmem>>, vector<1x128xf32>
    %63 = vector.broadcast %62 : vector<1x128xf32> to vector<8x128xf32>
    %64 = arith.addf %61, %63 : vector<8x128xf32>
    %cst_19 = arith.constant 0.000000e+00 : f32
    %65 = vector.broadcast %cst_19 : f32 to vector<8x128xf32>
    %66 = arith.cmpf ogt, %64, %65 : vector<8x128xf32>
    %cst_20 = arith.constant 0.00999999977 : f32
    %67 = vector.broadcast %cst_20 : f32 to vector<8x128xf32>
    %68 = arith.mulf %67, %64 : vector<8x128xf32>
    %69 = arith.select %66, %64, %68 : vector<8x128xi1>, vector<8x128xf32>
    %70 = arith.truncf %69 : vector<8x128xf32> to vector<8x128xbf16>
    %c0_21 = arith.constant 0 : index
    %c0_22 = arith.constant 0 : index
    %71 = vector.load %arg7[%c0_21, %c0_22] : memref<128x128xbf16, #tpu.memory_space<vmem>>, vector<128x128xbf16>
    %cst_23 = arith.constant dense<0.000000e+00> : vector<8x128xf32>
    %72 = tpu.matmul %70, %71, %cst_23 {dimension_numbers = #tpu.dot_dimension_numbers<[1], [0], [0], [1], [0, 0, 1, 1], [], []>} : vector<8x128xbf16>, vector<128x128xbf16>, vector<8x128xf32> -> vector<8x128xf32>
    %c0_24 = arith.constant 0 : index
    %c0_25 = arith.constant 0 : index
    %73 = vector.load %arg8[%c0_24, %c0_25] : memref<1x128xf32, #tpu.memory_space<vmem>>, vector<1x128xf32>
    %74 = vector.broadcast %73 : vector<1x128xf32> to vector<8x128xf32>
    %75 = arith.addf %72, %74 : vector<8x128xf32>
    %76 = vector.extract_strided_slice %75 {offsets = [0, 0], sizes = [8, 8], strides = [1, 1]} : vector<8x128xf32> to vector<8x8xf32>
    %cst_26 = arith.constant 5.000000e-01 : f32
    %77 = vector.broadcast %cst_26 : f32 to vector<8x8xf32>
    %78 = arith.mulf %77, %76 : vector<8x8xf32>
    %79 = math.tanh %78 : vector<8x8xf32>
    %cst_27 = arith.constant 5.000000e-01 : f32
    %80 = vector.broadcast %cst_27 : f32 to vector<8x8xf32>
    %81 = arith.mulf %80, %79 : vector<8x8xf32>
    %cst_28 = arith.constant 5.000000e-01 : f32
    %82 = vector.broadcast %cst_28 : f32 to vector<8x8xf32>
    %83 = arith.addf %81, %82 : vector<8x8xf32>
    %c0_29 = arith.constant 0 : index
    %c0_30 = arith.constant 0 : index
    %84 = vector.load %arg9[%c0_29, %c0_30] : memref<8x8xf32, #tpu.memory_space<vmem>>, vector<8x8xf32>
    tpu.vector_store %arg9[%c0_29, %c0_30], %83 {strides = array<i32>} : memref<8x8xf32, #tpu.memory_space<vmem>>, vector<8x8xf32>,
    return
  }
  func.func @transform_0(%arg0: i32) -> (i32, i32) {
    %c0_i32 = arith.constant 0 : i32
    %c0_i32_0 = arith.constant 0 : i32
    return %arg0, %c0_i32 : i32, i32
  }
  func.func @transform_1(%arg0: i32) -> (i32, i32) {
    %c0_i32 = arith.constant 0 : i32
    %c0_i32_0 = arith.constant 0 : i32
    %c0_i32_1 = arith.constant 0 : i32
    return %c0_i32, %c0_i32_0 : i32, i32
  }
  func.func @transform_2(%arg0: i32) -> (i32, i32) {
    %c0_i32 = arith.constant 0 : i32
    %c0_i32_0 = arith.constant 0 : i32
    %c0_i32_1 = arith.constant 0 : i32
    return %c0_i32, %c0_i32_0 : i32, i32
  }
  func.func @transform_3(%arg0: i32) -> (i32, i32) {
    %c0_i32 = arith.constant 0 : i32
    %c0_i32_0 = arith.constant 0 : i32
    %c0_i32_1 = arith.constant 0 : i32
    return %c0_i32, %c0_i32_0 : i32, i32
  }
  func.func @transform_4(%arg0: i32) -> (i32, i32) {
    %c0_i32 = arith.constant 0 : i32
    %c0_i32_0 = arith.constant 0 : i32
    %c0_i32_1 = arith.constant 0 : i32
    return %c0_i32, %c0_i32_0 : i32, i32
  }
  func.func @transform_5(%arg0: i32) -> (i32, i32) {
    %c0_i32 = arith.constant 0 : i32
    %c0_i32_0 = arith.constant 0 : i32
    %c0_i32_1 = arith.constant 0 : i32
    return %c0_i32, %c0_i32_0 : i32, i32
  }
  func.func @transform_6(%arg0: i32) -> (i32, i32) {
    %c0_i32 = arith.constant 0 : i32
    %c0_i32_0 = arith.constant 0 : i32
    %c0_i32_1 = arith.constant 0 : i32
    return %c0_i32, %c0_i32_0 : i32, i32
  }
  func.func @transform_7(%arg0: i32) -> (i32, i32) {
    %c0_i32 = arith.constant 0 : i32
    %c0_i32_0 = arith.constant 0 : i32
    %c0_i32_1 = arith.constant 0 : i32
    return %c0_i32, %c0_i32_0 : i32, i32
  }
  func.func @transform_8(%arg0: i32) -> (i32, i32) {
    %c0_i32 = arith.constant 0 : i32
    %c0_i32_0 = arith.constant 0 : i32
    return %arg0, %c0_i32 : i32, i32
  }
}

</mosaic_0001>

<llo_original>
// kernel: _forward_impl.1
$region0: #{_forward_impl.1}
  #allocation0 [shape = 'u32[]', space=smem, size = 0x4, offset = 0x4, fixed_abs, tag = 'smem constant byte address 0x4 - core index']
  #allocation1 [shape = 'u32[72,128]{1,0:T(1,128)}', space=vmem, size = 0x9000, scoped, tag = 'internal scratch']
  %s0 = inlined_call_operand.vmem [shape: f32[8,64], index: 0, kind: input, shape index: {}]
  %s1 = inlined_call_operand.hbm [shape: f32[64,1280], index: 1, kind: input, shape index: {}]
  %s2 = inlined_call_operand.vmem [shape: f32[1,1280], index: 2, kind: input, shape index: {}]
  %s3 = inlined_call_operand.hbm [shape: bf16[640,128], index: 3, kind: input, shape index: {}]
  %s4 = inlined_call_operand.hbm [shape: bf16[128,128], index: 4, kind: input, shape index: {}]
  %s5 = inlined_call_operand.vmem [shape: f32[1,128], index: 5, kind: input, shape index: {}]
  %s6 = inlined_call_operand.hbm [shape: bf16[128,128], index: 6, kind: input, shape index: {}]
  %s7 = inlined_call_operand.vmem [shape: f32[1,128], index: 7, kind: input, shape index: {}]
  %s8 = inlined_call_operand.vmem [shape: f32[8,8], index: 8, kind: output, shape index: {}]
  %s9 = sld [smem:[#allocation0]]
  $region58: #{_forward_impl.1} parent=0
    _
  %s11 = ssub.s32 1, %s9
  %s12 = scalar_select 0, %s11, %s9
  $region1: #{_forward_impl.1} parent=0
    #allocation2 [shape = 'u8[327680]{0}', space=vmem, size = 0x50000, scoped, tag = 'input window, operand 1, single buffered']
    #allocation3 [shape = 's32[1]{0}', space=sflag, size = 0x4, scoped, tag = 'scoped memory for _forward_impl.1']
    #allocation4 [shape = 'u8[163840]{0}', space=vmem, size = 0x28000, scoped, tag = 'input window, operand 3, single buffered']
    #allocation5 [shape = 's32[1]{0}', space=sflag, size = 0x4, scoped, tag = 'scoped memory for _forward_impl.1']
    #allocation6 [shape = 'u8[32768]{0}', space=vmem, size = 0x8000, scoped, tag = 'input window, operand 4, single buffered']
    #allocation7 [shape = 'u8[32768]{0}', space=vmem, size = 0x8000, scoped, tag = 'input window, operand 6, single buffered']
    #allocation8 [shape = 's32[1]{0}', space=sflag, size = 0x4, scoped, tag = 'scoped memory for _forward_impl.1']
    %13 = vsyncpa [#allocation3], 0
    %14 = vsyncpa [#allocation5], 0
    %15 = vsyncpa [#allocation8], 0
    // Predicated region
    $region2: #{_forward_impl.1} parent=1 // pred_check
      _
    $region3: #{_forward_impl.1} parent=1 // pred_check_branch
      %17 = sbr.rel (0) target = $region5
    $region4: #{_forward_impl.1} parent=1 // pred_region
      _
    $region5: #{_forward_impl.1} parent=1 // pred_fallthru
      _
    // Predicated region
    $region6: #{_forward_impl.1} parent=1 // pred_check
      _
    $region7: #{_forward_impl.1} parent=1 // pred_check_branch
      %19 = sbr.rel (0) target = $region9
    $region8: #{_forward_impl.1} parent=1 // pred_region
      %21 = vsyncadd [#allocation3], 0
      %s22 = sshll.u32 %s1, 4
      %s23 = int_to_ptr.hbm [resolvable:$true] %s22
      %s24 = sshll.u32 [#allocation2], 4
      %s25 = int_to_ptr.vmem [resolvable:$true] %s24
      %30 = dma.hbm_to_vmem [thread:$0]  %s23, 10240, %s25, [#allocation3], 1280, 1280, 80
    $region9: #{_forward_impl.1} parent=1 // pred_fallthru
      _
    // Predicated region
    $region10: #{_forward_impl.1} parent=1 // pred_check
      _
    $region11: #{_forward_impl.1} parent=1 // pred_check_branch
      %32 = sbr.rel (0) target = $region13
    $region12: #{_forward_impl.1} parent=1 // pred_region
      _
    $region13: #{_forward_impl.1} parent=1 // pred_fallthru
      _
    // Predicated region
    $region14: #{_forward_impl.1} parent=1 // pred_check
      _
    $region15: #{_forward_impl.1} parent=1 // pred_check_branch
      %34 = sbr.rel (0) target = $region17
    $region16: #{_forward_impl.1} parent=1 // pred_region
      %36 = vsyncadd [#allocation5], 0
      %s37 = sshll.u32 %s3, 4
      %s38 = int_to_ptr.hbm [resolvable:$true] %s37
      %s39 = sshll.u32 [#allocation4], 4
      %s40 = int_to_ptr.vmem [resolvable:$true] %s39
      %45 = dma.hbm_to_vmem [thread:$0]  %s38, 5120, %s40, [#allocation5], 64, 64, 4
    $region17: #{_forward_impl.1} parent=1 // pred_fallthru
      _
    // Predicated region
    $region18: #{_forward_impl.1} parent=1 // pred_check
      _
    $region19: #{_forward_impl.1} parent=1 // pred_check_branch
      %47 = sbr.rel (0) target = $region21
    $region20: #{_forward_impl.1} parent=1 // pred_region
      %49 = vsyncadd [#allocation5], 0
      %s50 = sshll.u32 %s4, 4
      %s51 = int_to_ptr.hbm [resolvable:$true] %s50
      %s52 = sshll.u32 [#allocation6], 4
      %s53 = int_to_ptr.vmem [resolvable:$true] %s52
      %58 = dma.hbm_to_vmem [thread:$0]  %s51, 1024, %s53, [#allocation5], 64, 64, 4
    $region21: #{_forward_impl.1} parent=1 // pred_fallthru
      _
    // Predicated region
    $region22: #{_forward_impl.1} parent=1 // pred_check
      _
    $region23: #{_forward_impl.1} parent=1 // pred_check_branch
      %60 = sbr.rel (0) target = $region25
    $region24: #{_forward_impl.1} parent=1 // pred_region
      _
    $region25: #{_forward_impl.1} parent=1 // pred_fallthru
      _
    // Predicated region
    $region26: #{_forward_impl.1} parent=1 // pred_check
      _
    $region27: #{_forward_impl.1} parent=1 // pred_check_branch
      %62 = sbr.rel (0) target = $region29
    $region28: #{_forward_impl.1} parent=1 // pred_region
      %64 = vsyncadd [#allocation8], 0
      %s65 = sshll.u32 %s6, 4
      %s66 = int_to_ptr.hbm [resolvable:$true] %s65
      %s67 = sshll.u32 [#allocation7], 4
      %s68 = int_to_ptr.vmem [resolvable:$true] %s67
      %73 = dma.hbm_to_vmem [thread:$0]  %s66, 1024, %s68, [#allocation8], 64, 64, 4
    $region29: #{_forward_impl.1} parent=1 // pred_fallthru
      _
    // Predicated region
    $region30: #{_forward_impl.1} parent=1 // pred_check
      _
    $region31: #{_forward_impl.1} parent=1 // pred_check_branch
      %75 = sbr.rel (0) target = $region33
    $region32: #{_forward_impl.1} parent=1 // pred_region
      _
    $region33: #{_forward_impl.1} parent=1 // pred_fallthru
      _
    // Predicated region
    $region34: #{_forward_impl.1} parent=1 // pred_check
      _
    $region35: #{_forward_impl.1} parent=1 // pred_check_branch
      %77 = sbr.rel (0) target = $region37
    $region36: #{_forward_impl.1} parent=1 // pred_region
      %79 = dma.done [#allocation3], 10240
    $region37: #{_forward_impl.1} parent=1 // pred_fallthru
      _
    // Predicated region
    $region38: #{_forward_impl.1} parent=1 // pred_check
      _
    $region39: #{_forward_impl.1} parent=1 // pred_check_branch
      %81 = sbr.rel (0) target = $region41
    $region40: #{_forward_impl.1} parent=1 // pred_region
      %83 = dma.done [#allocation5], 5120
    $region41: #{_forward_impl.1} parent=1 // pred_fallthru
      _
    // Predicated region
    $region42: #{_forward_impl.1} parent=1 // pred_check
      _
    $region43: #{_forward_impl.1} parent=1 // pred_check_branch
      %85 = sbr.rel (0) target = $region45
    $region44: #{_forward_impl.1} parent=1 // pred_region
      %87 = dma.done [#allocation5], 1024
    $region45: #{_forward_impl.1} parent=1 // pred_fallthru
      _
    // Predicated region
    $region46: #{_forward_impl.1} parent=1 // pred_check
      _
    $region47: #{_forward_impl.1} parent=1 // pred_check_branch
      %89 = sbr.rel (0) target = $region49
    $region48: #{_forward_impl.1} parent=1 // pred_region
      %91 = dma.done [#allocation8], 1024
    $region49: #{_forward_impl.1} parent=1 // pred_fallthru
      _
    %v92 = vld [vmem:[%s0] sm:$0xff]
    %v93 = vld [vmem:[#allocation2] sm:$0xff]
    %v94 = vld [vmem:[#allocation2 + $0x8] sm:$0xff]
    %v95 = vld [vmem:[#allocation2 + $0x10] sm:$0xff]
    %v96 = vld [vmem:[#allocation2 + $0x18] sm:$0xff]
    %v97 = vld [vmem:[#allocation2 + $0x20] sm:$0xff]
    %v98 = vld [vmem:[#allocation2 + $0x28] sm:$0xff]
    %v99 = vld [vmem:[#allocation2 + $0x30] sm:$0xff]
    %v100 = vld [vmem:[#allocation2 + $0x38] sm:$0xff]
    %v101 = vld [vmem:[#allocation2 + $0x40] sm:$0xff]
    %v102 = vld [vmem:[#allocation2 + $0x48] sm:$0xff]
    %v103 = vld [vmem:[#allocation2 + $0x50] sm:$0xff]
    %v104 = vld [vmem:[#allocation2 + $0x58] sm:$0xff]
    %v105 = vld [vmem:[#allocation2 + $0x60] sm:$0xff]
    %v106 = vld [vmem:[#allocation2 + $0x68] sm:$0xff]
    %v107 = vld [vmem:[#allocation2 + $0x70] sm:$0xff]
    %v108 = vld [vmem:[#allocation2 + $0x78] sm:$0xff]
    %v109 = vld [vmem:[#allocation2 + $0x80] sm:$0xff]
    %v110 = vld [vmem:[#allocation2 + $0x88] sm:$0xff]
    %v111 = vld [vmem:[#allocation2 + $0x90] sm:$0xff]
    %v112 = vld [vmem:[#allocation2 + $0x98] sm:$0xff]
    %v113 = vld [vmem:[#allocation2 + $0xa0] sm:$0xff]
    %v114 = vld [vmem:[#allocation2 + $0xa8] sm:$0xff]
    %v115 = vld [vmem:[#allocation2 + $0xb0] sm:$0xff]
    %v116 = vld [vmem:[#allocation2 + $0xb8] sm:$0xff]
    %v117 = vld [vmem:[#allocation2 + $0xc0] sm:$0xff]
    %v118 = vld [vmem:[#allocation2 + $0xc8] sm:$0xff]
    %v119 = vld [vmem:[#allocation2 + $0xd0] sm:$0xff]
    %v120 = vld [vmem:[#allocation2 + $0xd8] sm:$0xff]
    %v121 = vld [vmem:[#allocation2 + $0xe0] sm:$0xff]
    %v122 = vld [vmem:[#allocation2 + $0xe8] sm:$0xff]
    %v123 = vld [vmem:[#allocation2 + $0xf0] sm:$0xff]
    %v124 = vld [vmem:[#allocation2 + $0xf8] sm:$0xff]
    %v125 = vld [vmem:[#allocation2 + $0x100] sm:$0xff]
    %v126 = vld [vmem:[#allocation2 + $0x108] sm:$0xff]
    %v127 = vld [vmem:[#allocation2 + $0x110] sm:$0xff]
    %v128 = vld [vmem:[#allocation2 + $0x118] sm:$0xff]
    %v129 = vld [vmem:[#allocation2 + $0x120] sm:$0xff]
    %v130 = vld [vmem:[#allocation2 + $0x128] sm:$0xff]
    %v131 = vld [vmem:[#allocation2 + $0x130] sm:$0xff]
    %v132 = vld [vmem:[#allocation2 + $0x138] sm:$0xff]
    %v133 = vld [vmem:[#allocation2 + $0x140] sm:$0xff]
    %v134 = vld [vmem:[#allocation2 + $0x148] sm:$0xff]
    %v135 = vld [vmem:[#allocation2 + $0x150] sm:$0xff]
    %v136 = vld [vmem:[#allocation2 + $0x158] sm:$0xff]
    %v137 = vld [vmem:[#allocation2 + $0x160] sm:$0xff]
    %v138 = vld [vmem:[#allocation2 + $0x168] sm:$0xff]
    %v139 = vld [vmem:[#allocation2 + $0x170] sm:$0xff]
    %v140 = vld [vmem:[#allocation2 + $0x178] sm:$0xff]
    %v141 = vld [vmem:[#allocation2 + $0x180] sm:$0xff]
    %v142 = vld [vmem:[#allocation2 + $0x188] sm:$0xff]
    %v143 = vld [vmem:[#allocation2 + $0x190] sm:$0xff]
    %v144 = vld [vmem:[#allocation2 + $0x198] sm:$0xff]
    %v145 = vld [vmem:[#allocation2 + $0x1a0] sm:$0xff]
    %v146 = vld [vmem:[#allocation2 + $0x1a8] sm:$0xff]
    %v147 = vld [vmem:[#allocation2 + $0x1b0] sm:$0xff]
    %v148 = vld [vmem:[#allocation2 + $0x1b8] sm:$0xff]
    %v149 = vld [vmem:[#allocation2 + $0x1c0] sm:$0xff]
    %v150 = vld [vmem:[#allocation2 + $0x1c8] sm:$0xff]
    %v151 = vld [vmem:[#allocation2 + $0x1d0] sm:$0xff]
    %v152 = vld [vmem:[#allocation2 + $0x1d8] sm:$0xff]
    %v153 = vld [vmem:[#allocation2 + $0x1e0] sm:$0xff]
    %v154 = vld [vmem:[#allocation2 + $0x1e8] sm:$0xff]
    %v155 = vld [vmem:[#allocation2 + $0x1f0] sm:$0xff]
    %v156 = vld [vmem:[#allocation2 + $0x1f8] sm:$0xff]
    %v157 = vld [vmem:[#allocation2 + $0x200] sm:$0xff]
    %v158 = vld [vmem:[#allocation2 + $0x208] sm:$0xff]
    %v159 = vld [vmem:[#allocation2 + $0x210] sm:$0xff]
    %v160 = vld [vmem:[#allocation2 + $0x218] sm:$0xff]
    %v161 = vld [vmem:[#allocation2 + $0x220] sm:$0xff]
    %v162 = vld [vmem:[#allocation2 + $0x228] sm:$0xff]
    %v163 = vld [vmem:[#allocation2 + $0x230] sm:$0xff]
    %v164 = vld [vmem:[#allocation2 + $0x238] sm:$0xff]
    %v165 = vld [vmem:[#allocation2 + $0x240] sm:$0xff]
    %v166 = vld [vmem:[#allocation2 + $0x248] sm:$0xff]
    %v167 = vld [vmem:[#allocation2 + $0x250] sm:$0xff]
    %v168 = vld [vmem:[#allocation2 + $0x258] sm:$0xff]
    %v169 = vld [vmem:[#allocation2 + $0x260] sm:$0xff]
    %v170 = vld [vmem:[#allocation2 + $0x268] sm:$0xff]
    %v171 = vld [vmem:[#allocation2 + $0x270] sm:$0xff]
    %v172 = vld [vmem:[#allocation2 + $0x278] sm:$0xff]
    %v173 = vld [vmem:[%s2] sm:$0xff]
    %v174 = vld [vmem:[%s2 + $0x8] sm:$0x3]
    %v177 = vperm.slane %v173, 0
    %v178 = vperm.slane %v173, 1
    %v179 = vperm.slane %v173, 2
    %v180 = vperm.slane %v173, 3
    %v181 = vperm.slane %v173, 4
    %v182 = vperm.slane %v173, 5
    %v183 = vperm.slane %v173, 6
    %v184 = vperm.slane %v173, 7
    %v185 = vperm.slane %v174, 0
    %v186 = vperm.slane %v174, 1
    %vm197 = vcmask 523264
    %v199 = vsel %vm197, %v92, 0
    %201 = vmatpush.msra.mxu0 0.0
    %202 = vmatpush.msra.mxu0 0.0
    %203 = vmatpush.msra.mxu0 0.0
    %204 = vmatpush.msra.mxu0 0.0
    %205 = vmatpush.msra.mxu0 0.0
    %206 = vmatpush.msra.mxu0 0.0
    %207 = vmatpush.msra.mxu0 0.0
    %208 = vmatpush.msra.mxu0 0.0
    %209 = vmatpush.msra.mxu0 %v163
    %210 = vmatpush.msra.mxu0 %v153
    %211 = vmatpush.msra.mxu0 %v143
    %212 = vmatpush.msra.mxu0 %v133
    %213 = vmatpush.msra.mxu0 %v123
    %214 = vmatpush.msra.mxu0 %v113
    %215 = vmatpush.msra.mxu0 %v103
    %216 = vmatpush.msra.mxu0 %v93
    %217 = vmatmul.f32.gmra.mxu0 %v199
    %v218 = vpop.f32.mrf.mxu0
    %v219 = vadd.f32 %v177, %v218
    %220 = vdwg.mxu0
    %221 = vmatpush.msra.mxu0 0.0
    %222 = vmatpush.msra.mxu0 0.0
    %223 = vmatpush.msra.mxu0 0.0
    %224 = vmatpush.msra.mxu0 0.0
    %225 = vmatpush.msra.mxu0 0.0
    %226 = vmatpush.msra.mxu0 0.0
    %227 = vmatpush.msra.mxu0 0.0
    %228 = vmatpush.msra.mxu0 0.0
    %229 = vmatpush.msra.mxu0 %v164
    %230 = vmatpush.msra.mxu0 %v154
    %231 = vmatpush.msra.mxu0 %v144
    %232 = vmatpush.msra.mxu0 %v134
    %233 = vmatpush.msra.mxu0 %v124
    %234 = vmatpush.msra.mxu0 %v114
    %235 = vmatpush.msra.mxu0 %v104
    %236 = vmatpush.msra.mxu0 %v94
    %237 = vmatmul.f32.gmra.mxu0 %v199
    %v238 = vpop.f32.mrf.mxu0
    %v239 = vadd.f32 %v178, %v238
    %240 = vdwg.mxu0
    %241 = vmatpush.msra.mxu0 0.0
    %242 = vmatpush.msra.mxu0 0.0
    %243 = vmatpush.msra.mxu0 0.0
    %244 = vmatpush.msra.mxu0 0.0
    %245 = vmatpush.msra.mxu0 0.0
    %246 = vmatpush.msra.mxu0 0.0
    %247 = vmatpush.msra.mxu0 0.0
    %248 = vmatpush.msra.mxu0 0.0
    %249 = vmatpush.msra.mxu0 %v165
    %250 = vmatpush.msra.mxu0 %v155
    %251 = vmatpush.msra.mxu0 %v145
    %252 = vmatpush.msra.mxu0 %v135
    %253 = vmatpush.msra.mxu0 %v125
    %254 = vmatpush.msra.mxu0 %v115
    %255 = vmatpush.msra.mxu0 %v105
    %256 = vmatpush.msra.mxu0 %v95
    %257 = vmatmul.f32.gmra.mxu0 %v199
    %v258 = vpop.f32.mrf.mxu0
    %v259 = vadd.f32 %v179, %v258
    %260 = vdwg.mxu0
    %261 = vmatpush.msra.mxu0 0.0
    %262 = vmatpush.msra.mxu0 0.0
    %263 = vmatpush.msra.mxu0 0.0
    %264 = vmatpush.msra.mxu0 0.0
    %265 = vmatpush.msra.mxu0 0.0
    %266 = vmatpush.msra.mxu0 0.0
    %267 = vmatpush.msra.mxu0 0.0
    %268 = vmatpush.msra.mxu0 0.0
    %269 = vmatpush.msra.mxu0 %v166
    %270 = vmatpush.msra.mxu0 %v156
    %271 = vmatpush.msra.mxu0 %v146
    %272 = vmatpush.msra.mxu0 %v136
    %273 = vmatpush.msra.mxu0 %v126
    %274 = vmatpush.msra.mxu0 %v116
    %275 = vmatpush.msra.mxu0 %v106
    %276 = vmatpush.msra.mxu0 %v96
    %277 = vmatmul.f32.gmra.mxu0 %v199
    %v278 = vpop.f32.mrf.mxu0
    %v279 = vadd.f32 %v180, %v278
    %280 = vdwg.mxu0
    %281 = vmatpush.msra.mxu0 0.0
    %282 = vmatpush.msra.mxu0 0.0
    %283 = vmatpush.msra.mxu0 0.0
    %284 = vmatpush.msra.mxu0 0.0
    %285 = vmatpush.msra.mxu0 0.0
    %286 = vmatpush.msra.mxu0 0.0
    %287 = vmatpush.msra.mxu0 0.0
    %288 = vmatpush.msra.mxu0 0.0
    %289 = vmatpush.msra.mxu0 %v167
    %290 = vmatpush.msra.mxu0 %v157
    %291 = vmatpush.msra.mxu0 %v147
    %292 = vmatpush.msra.mxu0 %v137
    %293 = vmatpush.msra.mxu0 %v127
    %294 = vmatpush.msra.mxu0 %v117
    %295 = vmatpush.msra.mxu0 %v107
    %296 = vmatpush.msra.mxu0 %v97
    %297 = vmatmul.f32.gmra.mxu0 %v199
    %v298 = vpop.f32.mrf.mxu0
    %v299 = vadd.f32 %v181, %v298
    %300 = vdwg.mxu0
    %301 = vmatpush.msra.mxu0 0.0
    %302 = vmatpush.msra.mxu0 0.0
    %303 = vmatpush.msra.mxu0 0.0
    %304 = vmatpush.msra.mxu0 0.0
    %305 = vmatpush.msra.mxu0 0.0
    %306 = vmatpush.msra.mxu0 0.0
    %307 = vmatpush.msra.mxu0 0.0
    %308 = vmatpush.msra.mxu0 0.0
    %309 = vmatpush.msra.mxu0 %v168
    %310 = vmatpush.msra.mxu0 %v158
    %311 = vmatpush.msra.mxu0 %v148
    %312 = vmatpush.msra.mxu0 %v138
    %313 = vmatpush.msra.mxu0 %v128
    %314 = vmatpush.msra.mxu0 %v118
    %315 = vmatpush.msra.mxu0 %v108
    %316 = vmatpush.msra.mxu0 %v98
    %317 = vmatmul.f32.gmra.mxu0 %v199
    %v318 = vpop.f32.mrf.mxu0
    %v319 = vadd.f32 %v182, %v318
    %320 = vdwg.mxu0
    %321 = vmatpush.msra.mxu0 0.0
    %322 = vmatpush.msra.mxu0 0.0
    %323 = vmatpush.msra.mxu0 0.0
    %324 = vmatpush.msra.mxu0 0.0
    %325 = vmatpush.msra.mxu0 0.0
    %326 = vmatpush.msra.mxu0 0.0
    %327 = vmatpush.msra.mxu0 0.0
    %328 = vmatpush.msra.mxu0 0.0
    %329 = vmatpush.msra.mxu0 %v169
    %330 = vmatpush.msra.mxu0 %v159
    %331 = vmatpush.msra.mxu0 %v149
    %332 = vmatpush.msra.mxu0 %v139
    %333 = vmatpush.msra.mxu0 %v129
    %334 = vmatpush.msra.mxu0 %v119
    %335 = vmatpush.msra.mxu0 %v109
    %336 = vmatpush.msra.mxu0 %v99
    %337 = vmatmul.f32.gmra.mxu0 %v199
    %v338 = vpop.f32.mrf.mxu0
    %v339 = vadd.f32 %v183, %v338
    %340 = vdwg.mxu0
    %341 = vmatpush.msra.mxu0 0.0
    %342 = vmatpush.msra.mxu0 0.0
    %343 = vmatpush.msra.mxu0 0.0
    %344 = vmatpush.msra.mxu0 0.0
    %345 = vmatpush.msra.mxu0 0.0
    %346 = vmatpush.msra.mxu0 0.0
    %347 = vmatpush.msra.mxu0 0.0
    %348 = vmatpush.msra.mxu0 0.0
    %349 = vmatpush.msra.mxu0 %v170
    %350 = vmatpush.msra.mxu0 %v160
    %351 = vmatpush.msra.mxu0 %v150
    %352 = vmatpush.msra.mxu0 %v140
    %353 = vmatpush.msra.mxu0 %v130
    %354 = vmatpush.msra.mxu0 %v120
    %355 = vmatpush.msra.mxu0 %v110
    %356 = vmatpush.msra.mxu0 %v100
    %357 = vmatmul.f32.gmra.mxu0 %v199
    %v358 = vpop.f32.mrf.mxu0
    %v359 = vadd.f32 %v184, %v358
    %360 = vdwg.mxu0
    %361 = vmatpush.msra.mxu0 0.0
    %362 = vmatpush.msra.mxu0 0.0
    %363 = vmatpush.msra.mxu0 0.0
    %364 = vmatpush.msra.mxu0 0.0
    %365 = vmatpush.msra.mxu0 0.0
    %366 = vmatpush.msra.mxu0 0.0
    %367 = vmatpush.msra.mxu0 0.0
    %368 = vmatpush.msra.mxu0 0.0
    %369 = vmatpush.msra.mxu0 %v171
    %370 = vmatpush.msra.mxu0 %v161
    %371 = vmatpush.msra.mxu0 %v151
    %372 = vmatpush.msra.mxu0 %v141
    %373 = vmatpush.msra.mxu0 %v131
    %374 = vmatpush.msra.mxu0 %v121
    %375 = vmatpush.msra.mxu0 %v111
    %376 = vmatpush.msra.mxu0 %v101
    %377 = vmatmul.f32.gmra.mxu0 %v199
    %v378 = vpop.f32.mrf.mxu0
    %v379 = vadd.f32 %v185, %v378
    %380 = vdwg.mxu0
    %381 = vmatpush.msra.mxu0 0.0
    %382 = vmatpush.msra.mxu0 0.0
    %383 = vmatpush.msra.mxu0 0.0
    %384 = vmatpush.msra.mxu0 0.0
    %385 = vmatpush.msra.mxu0 0.0
    %386 = vmatpush.msra.mxu0 0.0
    %387 = vmatpush.msra.mxu0 0.0
    %388 = vmatpush.msra.mxu0 0.0
    %389 = vmatpush.msra.mxu0 %v172
    %390 = vmatpush.msra.mxu0 %v162
    %391 = vmatpush.msra.mxu0 %v152
    %392 = vmatpush.msra.mxu0 %v142
    %393 = vmatpush.msra.mxu0 %v132
    %394 = vmatpush.msra.mxu0 %v122
    %395 = vmatpush.msra.mxu0 %v112
    %396 = vmatpush.msra.mxu0 %v102
    %397 = vmatmul.f32.gmra.mxu0 %v199
    %v398 = vpop.f32.mrf.mxu0
    %v399 = vadd.f32 %v186, %v398
    %400 = vdwg.mxu0
    %401 = vrot.lane.b32.xlu0 %v219, 64
    %v402 = vpop.permute.xlu0 %401
    %v403 = vmul.f32 %v219, %v219
    %v404 = vmul.f32 %v402, %v402
    %v405 = vadd.f32 %v403, %v404
    %vm406 = vcmp.gt.f32.partialorder %v405, 1e-30
    %v407 = vsel %vm406, %v405, 1.0
    %v408 = vrsqrt.pop %v407
    %v409 = vmul.f32 %v408, %v407
    %v410 = vmul.f32 %v409, %v408
    %v411 = vmul.f32 0.5, %v410
    %v412 = vsub.f32 1.5, %v411
    %v413 = vmul.f32 %v408, %v412
    %vm414 = vweird.f32 %v407
    %vm415 = vweird.f32 %v408
    %vm416 = vmor %vm414, %vm415
    %v417 = vsel %vm416, %v408, %v413
    %v418 = vmul.f32 %v405, %v417
    %v419 = vlaneseq
    %v420 = vand.u32 %v419, 127
    %vm421 = vcmp.lt.s32.totalorder %v420, 64
    %v422 = vsel %vm421, 1, 0
    %v423 = vcvt.s32.f32 %v422
    %v424 = vmul.f32 %v219, %v417
    %v425 = vsel %vm406, %v424, %v423
    %v426 = vmul.f32 %v402, %v417
    %v427 = vsub.f32 1.0, %v423
    %v428 = vsel %vm406, %v426, %v427
    %v429 = vmul.f32 %v425, %v259
    %v430 = vmul.f32 %v428, %v279
    %v431 = vadd.f32 %v429, %v430
    %v432 = vmul.f32 %v425, %v299
    %v433 = vmul.f32 %v428, %v319
    %v434 = vadd.f32 %v432, %v433
    %v435 = vmul.f32 %v425, %v339
    %v436 = vmul.f32 %v428, %v359
    %v437 = vadd.f32 %v435, %v436
    %v438 = vmul.f32 %v425, %v379
    %v439 = vmul.f32 %v428, %v399
    %v440 = vadd.f32 %v438, %v439
    %v441 = vpack.c.bf16 %v418, %v418
    %v442 = vpack.c.bf16 %v431, %v431
    %v443 = vpack.c.bf16 %v434, %v434
    %v444 = vpack.c.bf16 %v437, %v437
    %v445 = vpack.c.bf16 %v440, %v440
    %v446 = vld [vmem:[#allocation4] sm:$0xf]
    %v447 = vld [vmem:[#allocation4 + $0x4] sm:$0xf]
    %v448 = vld [vmem:[#allocation4 + $0x8] sm:$0xf]
    %v449 = vld [vmem:[#allocation4 + $0xc] sm:$0xf]
    %v450 = vld [vmem:[#allocation4 + $0x10] sm:$0xf]
    %v451 = vld [vmem:[#allocation4 + $0x14] sm:$0xf]
    %v452 = vld [vmem:[#allocation4 + $0x18] sm:$0xf]
    %v453 = vld [vmem:[#allocation4 + $0x1c] sm:$0xf]
    %v454 = vld [vmem:[#allocation4 + $0x20] sm:$0xf]
    %v455 = vld [vmem:[#allocation4 + $0x24] sm:$0xf]
    %v456 = vld [vmem:[#allocation4 + $0x28] sm:$0xf]
    %v457 = vld [vmem:[#allocation4 + $0x2c] sm:$0xf]
    %v458 = vld [vmem:[#allocation4 + $0x30] sm:$0xf]
    %v459 = vld [vmem:[#allocation4 + $0x34] sm:$0xf]
    %v460 = vld [vmem:[#allocation4 + $0x38] sm:$0xf]
    %v461 = vld [vmem:[#allocation4 + $0x3c] sm:$0xf]
    %v462 = vld [vmem:[#allocation4 + $0x40] sm:$0xf]
    %v463 = vld [vmem:[#allocation4 + $0x44] sm:$0xf]
    %v464 = vld [vmem:[#allocation4 + $0x48] sm:$0xf]
    %v465 = vld [vmem:[#allocation4 + $0x4c] sm:$0xf]
    %v466 = vld [vmem:[#allocation4 + $0x50] sm:$0xf]
    %v467 = vld [vmem:[#allocation4 + $0x54] sm:$0xf]
    %v468 = vld [vmem:[#allocation4 + $0x58] sm:$0xf]
    %v469 = vld [vmem:[#allocation4 + $0x5c] sm:$0xf]
    %v470 = vld [vmem:[#allocation4 + $0x60] sm:$0xf]
    %v471 = vld [vmem:[#allocation4 + $0x64] sm:$0xf]
    %v472 = vld [vmem:[#allocation4 + $0x68] sm:$0xf]
    %v473 = vld [vmem:[#allocation4 + $0x6c] sm:$0xf]
    %v474 = vld [vmem:[#allocation4 + $0x70] sm:$0xf]
    %v475 = vld [vmem:[#allocation4 + $0x74] sm:$0xf]
    %v476 = vld [vmem:[#allocation4 + $0x78] sm:$0xf]
    %v477 = vld [vmem:[#allocation4 + $0x7c] sm:$0xf]
    %v478 = vld [vmem:[#allocation4 + $0x80] sm:$0xf]
    %v479 = vld [vmem:[#allocation4 + $0x84] sm:$0xf]
    %v480 = vld [vmem:[#allocation4 + $0x88] sm:$0xf]
    %v481 = vld [vmem:[#allocation4 + $0x8c] sm:$0xf]
    %v482 = vld [vmem:[#allocation4 + $0x90] sm:$0xf]
    %v483 = vld [vmem:[#allocation4 + $0x94] sm:$0xf]
    %v484 = vld [vmem:[#allocation4 + $0x98] sm:$0xf]
    %v485 = vld [vmem:[#allocation4 + $0x9c] sm:$0xf]
    %v486 = vld [vmem:[#allocation4 + $0xa0] sm:$0xf]
    %v487 = vld [vmem:[#allocation4 + $0xa4] sm:$0xf]
    %v488 = vld [vmem:[#allocation4 + $0xa8] sm:$0xf]
    %v489 = vld [vmem:[#allocation4 + $0xac] sm:$0xf]
    %v490 = vld [vmem:[#allocation4 + $0xb0] sm:$0xf]
    %v491 = vld [vmem:[#allocation4 + $0xb4] sm:$0xf]
    %v492 = vld [vmem:[#allocation4 + $0xb8] sm:$0xf]
    %v493 = vld [vmem:[#allocation4 + $0xbc] sm:$0xf]
    %v494 = vld [vmem:[#allocation4 + $0xc0] sm:$0xf]
    %v495 = vld [vmem:[#allocation4 + $0xc4] sm:$0xf]
    %v496 = vld [vmem:[#allocation4 + $0xc8] sm:$0xf]
    %v497 = vld [vmem:[#allocation4 + $0xcc] sm:$0xf]
    %v498 = vld [vmem:[#allocation4 + $0xd0] sm:$0xf]
    %v499 = vld [vmem:[#allocation4 + $0xd4] sm:$0xf]
    %v500 = vld [vmem:[#allocation4 + $0xd8] sm:$0xf]
    %v501 = vld [vmem:[#allocation4 + $0xdc] sm:$0xf]
    %v502 = vld [vmem:[#allocation4 + $0xe0] sm:$0xf]
    %v503 = vld [vmem:[#allocation4 + $0xe4] sm:$0xf]
    %v504 = vld [vmem:[#allocation4 + $0xe8] sm:$0xf]
    %v505 = vld [vmem:[#allocation4 + $0xec] sm:$0xf]
    %v506 = vld [vmem:[#allocation4 + $0xf0] sm:$0xf]
    %v507 = vld [vmem:[#allocation4 + $0xf4] sm:$0xf]
    %v508 = vld [vmem:[#allocation4 + $0xf8] sm:$0xf]
    %v509 = vld [vmem:[#allocation4 + $0xfc] sm:$0xf]
    %v510 = vld [vmem:[#allocation4 + $0x100] sm:$0xf]
    %v511 = vld [vmem:[#allocation4 + $0x104] sm:$0xf]
    %v512 = vld [vmem:[#allocation4 + $0x108] sm:$0xf]
    %v513 = vld [vmem:[#allocation4 + $0x10c] sm:$0xf]
    %v514 = vld [vmem:[#allocation4 + $0x110] sm:$0xf]
    %v515 = vld [vmem:[#allocation4 + $0x114] sm:$0xf]
    %v516 = vld [vmem:[#allocation4 + $0x118] sm:$0xf]
    %v517 = vld [vmem:[#allocation4 + $0x11c] sm:$0xf]
    %v518 = vld [vmem:[#allocation4 + $0x120] sm:$0xf]
    %v519 = vld [vmem:[#allocation4 + $0x124] sm:$0xf]
    %v520 = vld [vmem:[#allocation4 + $0x128] sm:$0xf]
    %v521 = vld [vmem:[#allocation4 + $0x12c] sm:$0xf]
    %v522 = vld [vmem:[#allocation4 + $0x130] sm:$0xf]
    %v523 = vld [vmem:[#allocation4 + $0x134] sm:$0xf]
    %v524 = vld [vmem:[#allocation4 + $0x138] sm:$0xf]
    %v525 = vld [vmem:[#allocation4 + $0x13c] sm:$0xf]
    %v606 = vunpack.c.l.b16 %v446
    %v607 = vunpack.c.l.b16 %v447
    %v608 = vunpack.c.l.b16 %v448
    %v609 = vunpack.c.l.b16 %v449
    %v610 = vunpack.c.l.b16 %v450
    %v611 = vunpack.c.l.b16 %v451
    %v612 = vunpack.c.l.b16 %v452
    %v613 = vunpack.c.l.b16 %v453
    %v614 = vunpack.c.l.b16 %v454
    %v615 = vunpack.c.l.b16 %v455
    %v616 = vunpack.c.l.b16 %v456
    %v617 = vunpack.c.l.b16 %v457
    %v618 = vunpack.c.l.b16 %v458
    %v619 = vunpack.c.l.b16 %v459
    %v620 = vunpack.c.l.b16 %v460
    %v621 = vunpack.c.l.b16 %v461
    %v622 = vunpack.c.l.b16 %v462
    %v623 = vunpack.c.l.b16 %v463
    %v624 = vunpack.c.l.b16 %v464
    %v625 = vunpack.c.l.b16 %v465
    %v626 = vunpack.c.l.b16 %v466
    %v627 = vunpack.c.l.b16 %v467
    %v628 = vunpack.c.l.b16 %v468
    %v629 = vunpack.c.l.b16 %v469
    %v630 = vunpack.c.l.b16 %v470
    %v631 = vunpack.c.l.b16 %v471
    %v632 = vunpack.c.l.b16 %v472
    %v633 = vunpack.c.l.b16 %v473
    %v634 = vunpack.c.l.b16 %v474
    %v635 = vunpack.c.l.b16 %v475
    %v636 = vunpack.c.l.b16 %v476
    %v637 = vunpack.c.l.b16 %v477
    %v638 = vunpack.c.l.b16 %v478
    %v639 = vunpack.c.l.b16 %v479
    %v640 = vunpack.c.l.b16 %v480
    %v641 = vunpack.c.l.b16 %v481
    %v642 = vunpack.c.l.b16 %v482
    %v643 = vunpack.c.l.b16 %v483
    %v644 = vunpack.c.l.b16 %v484
    %v645 = vunpack.c.l.b16 %v485
    %v646 = vunpack.c.l.b16 %v486
    %v647 = vunpack.c.l.b16 %v487
    %v648 = vunpack.c.l.b16 %v488
    %v649 = vunpack.c.l.b16 %v489
    %v650 = vunpack.c.l.b16 %v490
    %v651 = vunpack.c.l.b16 %v491
    %v652 = vunpack.c.l.b16 %v492
    %v653 = vunpack.c.l.b16 %v493
    %v654 = vunpack.c.l.b16 %v494
    %v655 = vunpack.c.l.b16 %v495
    %v656 = vunpack.c.l.b16 %v496
    %v657 = vunpack.c.l.b16 %v497
    %v658 = vunpack.c.l.b16 %v498
    %v659 = vunpack.c.l.b16 %v499
    %v660 = vunpack.c.l.b16 %v500
    %v661 = vunpack.c.l.b16 %v501
    %v662 = vunpack.c.l.b16 %v502
    %v663 = vunpack.c.l.b16 %v503
    %v664 = vunpack.c.l.b16 %v504
    %v665 = vunpack.c.l.b16 %v505
    %v666 = vunpack.c.l.b16 %v506
    %v667 = vunpack.c.l.b16 %v507
    %v668 = vunpack.c.l.b16 %v508
    %v669 = vunpack.c.l.b16 %v509
    %v670 = vunpack.c.l.b16 %v510
    %v671 = vunpack.c.l.b16 %v511
    %v672 = vunpack.c.l.b16 %v512
    %v673 = vunpack.c.l.b16 %v513
    %v674 = vunpack.c.l.b16 %v514
    %v675 = vunpack.c.l.b16 %v515
    %v676 = vunpack.c.l.b16 %v516
    %v677 = vunpack.c.l.b16 %v517
    %v678 = vunpack.c.l.b16 %v518
    %v679 = vunpack.c.l.b16 %v519
    %v680 = vunpack.c.l.b16 %v520
    %v681 = vunpack.c.l.b16 %v521
    %v682 = vunpack.c.l.b16 %v522
    %v683 = vunpack.c.l.b16 %v523
    %v684 = vunpack.c.l.b16 %v524
    %v685 = vunpack.c.l.b16 %v525
    %v686 = vpack.c.b16 %v607, %v606
    %v687 = vpack.c.b16 %v609, %v608
    %v688 = vpack.c.b16 %v611, %v610
    %v689 = vpack.c.b16 %v613, %v612
    %v690 = vpack.c.b16 %v615, %v614
    %v691 = vpack.c.b16 %v617, %v616
    %v692 = vpack.c.b16 %v619, %v618
    %v693 = vpack.c.b16 %v621, %v620
    %v694 = vpack.c.b16 %v623, %v622
    %v695 = vpack.c.b16 %v625, %v624
    %v696 = vpack.c.b16 %v627, %v626
    %v697 = vpack.c.b16 %v629, %v628
    %v698 = vpack.c.b16 %v631, %v630
    %v699 = vpack.c.b16 %v633, %v632
    %v700 = vpack.c.b16 %v635, %v634
    %v701 = vpack.c.b16 %v637, %v636
    %v702 = vpack.c.b16 %v639, %v638
    %v703 = vpack.c.b16 %v641, %v640
    %v704 = vpack.c.b16 %v643, %v642
    %v705 = vpack.c.b16 %v645, %v644
    %v706 = vpack.c.b16 %v647, %v646
    %v707 = vpack.c.b16 %v649, %v648
    %v708 = vpack.c.b16 %v651, %v650
    %v709 = vpack.c.b16 %v653, %v652
    %v710 = vpack.c.b16 %v655, %v654
    %v711 = vpack.c.b16 %v657, %v656
    %v712 = vpack.c.b16 %v659, %v658
    %v713 = vpack.c.b16 %v661, %v660
    %v714 = vpack.c.b16 %v663, %v662
    %v715 = vpack.c.b16 %v665, %v664
    %v716 = vpack.c.b16 %v667, %v666
    %v717 = vpack.c.b16 %v669, %v668
    %v718 = vpack.c.b16 %v671, %v670
    %v719 = vpack.c.b16 %v673, %v672
    %v720 = vpack.c.b16 %v675, %v674
    %v721 = vpack.c.b16 %v677, %v676
    %v722 = vpack.c.b16 %v679, %v678
    %v723 = vpack.c.b16 %v681, %v680
    %v724 = vpack.c.b16 %v683, %v682
    %v725 = vpack.c.b16 %v685, %v684
    %766 = vmatpush.bf16.msra.mxu0 %v693
    %767 = vmatpush.bf16.msra.mxu0 %v692
    %768 = vmatpush.bf16.msra.mxu0 %v691
    %769 = vmatpush.bf16.msra.mxu0 %v690
    %770 = vmatpush.bf16.msra.mxu0 %v689
    %771 = vmatpush.bf16.msra.mxu0 %v688
    %772 = vmatpush.bf16.msra.mxu0 %v687
    %773 = vmatpush.bf16.msra.mxu0 %v686
    %774 = vmatmul.bf16.gmra.mxu0 %v441
    %v775 = vpop.f32.mrf.mxu0
    %v776 = vadd.f32 0.0, %v775
    %v777 = vpop.f32.mrf.mxu0
    %778 = vdwg.mxu0
    %779 = vmatpush.bf16.msra.mxu0 %v701
    %780 = vmatpush.bf16.msra.mxu0 %v700
    %781 = vmatpush.bf16.msra.mxu0 %v699
    %782 = vmatpush.bf16.msra.mxu0 %v698
    %783 = vmatpush.bf16.msra.mxu0 %v697
    %784 = vmatpush.bf16.msra.mxu0 %v696
    %785 = vmatpush.bf16.msra.mxu0 %v695
    %786 = vmatpush.bf16.msra.mxu0 %v694
    %787 = vmatmul.bf16.gmra.mxu0 %v442
    %v788 = vpop.f32.mrf.mxu0
    %v789 = vadd.f32 %v776, %v788
    %v790 = vpop.f32.mrf.mxu0
    %791 = vdwg.mxu0
    %792 = vmatpush.bf16.msra.mxu0 %v709
    %793 = vmatpush.bf16.msra.mxu0 %v708
    %794 = vmatpush.bf16.msra.mxu0 %v707
    %795 = vmatpush.bf16.msra.mxu0 %v706
    %796 = vmatpush.bf16.msra.mxu0 %v705
    %797 = vmatpush.bf16.msra.mxu0 %v704
    %798 = vmatpush.bf16.msra.mxu0 %v703
    %799 = vmatpush.bf16.msra.mxu0 %v702
    %800 = vmatmul.bf16.gmra.mxu0 %v443
    %v801 = vpop.f32.mrf.mxu0
    %v802 = vadd.f32 %v789, %v801
    %v803 = vpop.f32.mrf.mxu0
    %804 = vdwg.mxu0
    %805 = vmatpush.bf16.msra.mxu0 %v717
    %806 = vmatpush.bf16.msra.mxu0 %v716
    %807 = vmatpush.bf16.msra.mxu0 %v715
    %808 = vmatpush.bf16.msra.mxu0 %v714
    %809 = vmatpush.bf16.msra.mxu0 %v713
    %810 = vmatpush.bf16.msra.mxu0 %v712
    %811 = vmatpush.bf16.msra.mxu0 %v711
    %812 = vmatpush.bf16.msra.mxu0 %v710
    %813 = vmatmul.bf16.gmra.mxu0 %v444
    %v814 = vpop.f32.mrf.mxu0
    %v815 = vadd.f32 %v802, %v814
    %v816 = vpop.f32.mrf.mxu0
    %817 = vdwg.mxu0
    %818 = vmatpush.bf16.msra.mxu0 %v725
    %819 = vmatpush.bf16.msra.mxu0 %v724
    %820 = vmatpush.bf16.msra.mxu0 %v723
    %821 = vmatpush.bf16.msra.mxu0 %v722
    %822 = vmatpush.bf16.msra.mxu0 %v721
    %823 = vmatpush.bf16.msra.mxu0 %v720
    %824 = vmatpush.bf16.msra.mxu0 %v719
    %825 = vmatpush.bf16.msra.mxu0 %v718
    %826 = vmatmul.bf16.gmra.mxu0 %v445
    %v827 = vpop.f32.mrf.mxu0
    %v828 = vadd.f32 %v815, %v827
    %v829 = vpop.f32.mrf.mxu0
    %830 = vdwg.mxu0
    %v831 = vadd.f32 %v239, %v828
    %vm832 = vcmp.gt.f32.partialorder %v831, 0.0
    %v833 = vmul.f32 %v831, 0.01
    %v834 = vsel %vm832, %v831, %v833
    %v835 = vpack.c.bf16 %v834, %v834
    %v836 = vld [vmem:[#allocation6] sm:$0xf]
    %v837 = vld [vmem:[#allocation6 + $0x4] sm:$0xf]
    %v838 = vld [vmem:[#allocation6 + $0x8] sm:$0xf]
    %v839 = vld [vmem:[#allocation6 + $0xc] sm:$0xf]
    %v840 = vld [vmem:[#allocation6 + $0x10] sm:$0xf]
    %v841 = vld [vmem:[#allocation6 + $0x14] sm:$0xf]
    %v842 = vld [vmem:[#allocation6 + $0x18] sm:$0xf]
    %v843 = vld [vmem:[#allocation6 + $0x1c] sm:$0xf]
    %v844 = vld [vmem:[#allocation6 + $0x20] sm:$0xf]
    %v845 = vld [vmem:[#allocation6 + $0x24] sm:$0xf]
    %v846 = vld [vmem:[#allocation6 + $0x28] sm:$0xf]
    %v847 = vld [vmem:[#allocation6 + $0x2c] sm:$0xf]
    %v848 = vld [vmem:[#allocation6 + $0x30] sm:$0xf]
    %v849 = vld [vmem:[#allocation6 + $0x34] sm:$0xf]
    %v850 = vld [vmem:[#allocation6 + $0x38] sm:$0xf]
    %v851 = vld [vmem:[#allocation6 + $0x3c] sm:$0xf]
    %v852 = vld [vmem:[%s5] sm:$0x1]
    %v854 = vperm.slane %v852, 0
    %v872 = vunpack.c.l.b16 %v836
    %v873 = vunpack.c.l.b16 %v837
    %v874 = vunpack.c.l.b16 %v838
    %v875 = vunpack.c.l.b16 %v839
    %v876 = vunpack.c.l.b16 %v840
    %v877 = vunpack.c.l.b16 %v841
    %v878 = vunpack.c.l.b16 %v842
    %v879 = vunpack.c.l.b16 %v843
    %v880 = vunpack.c.l.b16 %v844
    %v881 = vunpack.c.l.b16 %v845
    %v882 = vunpack.c.l.b16 %v846
    %v883 = vunpack.c.l.b16 %v847
    %v884 = vunpack.c.l.b16 %v848
    %v885 = vunpack.c.l.b16 %v849
    %v886 = vunpack.c.l.b16 %v850
    %v887 = vunpack.c.l.b16 %v851
    %v888 = vpack.c.b16 %v873, %v872
    %v889 = vpack.c.b16 %v875, %v874
    %v890 = vpack.c.b16 %v877, %v876
    %v891 = vpack.c.b16 %v879, %v878
    %v892 = vpack.c.b16 %v881, %v880
    %v893 = vpack.c.b16 %v883, %v882
    %v894 = vpack.c.b16 %v885, %v884
    %v895 = vpack.c.b16 %v887, %v886
    %904 = vmatpush.bf16.msra.mxu0 %v895
    %905 = vmatpush.bf16.msra.mxu0 %v894
    %906 = vmatpush.bf16.msra.mxu0 %v893
    %907 = vmatpush.bf16.msra.mxu0 %v892
    %908 = vmatpush.bf16.msra.mxu0 %v891
    %909 = vmatpush.bf16.msra.mxu0 %v890
    %910 = vmatpush.bf16.msra.mxu0 %v889
    %911 = vmatpush.bf16.msra.mxu0 %v888
    %912 = vmatmul.bf16.gmra.mxu0 %v835
    %v913 = vpop.f32.mrf.mxu0
    %v914 = vadd.f32 %v854, %v913
    %v915 = vpop.f32.mrf.mxu0
    %916 = vdwg.mxu0
    %vm917 = vcmp.gt.f32.partialorder %v914, 0.0
    %v918 = vmul.f32 %v914, 0.01
    %v919 = vsel %vm917, %v914, %v918
    %v920 = vpack.c.bf16 %v919, %v919
    %v921 = vld [vmem:[#allocation7] sm:$0xf]
    %v922 = vld [vmem:[#allocation7 + $0x4] sm:$0xf]
    %v923 = vld [vmem:[#allocation7 + $0x8] sm:$0xf]
    %v924 = vld [vmem:[#allocation7 + $0xc] sm:$0xf]
    %v925 = vld [vmem:[#allocation7 + $0x10] sm:$0xf]
    %v926 = vld [vmem:[#allocation7 + $0x14] sm:$0xf]
    %v927 = vld [vmem:[#allocation7 + $0x18] sm:$0xf]
    %v928 = vld [vmem:[#allocation7 + $0x1c] sm:$0xf]
    %v929 = vld [vmem:[#allocation7 + $0x20] sm:$0xf]
    %v930 = vld [vmem:[#allocation7 + $0x24] sm:$0xf]
    %v931 = vld [vmem:[#allocation7 + $0x28] sm:$0xf]
    %v932 = vld [vmem:[#allocation7 + $0x2c] sm:$0xf]
    %v933 = vld [vmem:[#allocation7 + $0x30] sm:$0xf]
    %v934 = vld [vmem:[#allocation7 + $0x34] sm:$0xf]
    %v935 = vld [vmem:[#allocation7 + $0x38] sm:$0xf]
    %v936 = vld [vmem:[#allocation7 + $0x3c] sm:$0xf]
    %v937 = vld [vmem:[%s7] sm:$0x1]
    %v939 = vperm.slane %v937, 0
    %v957 = vunpack.c.l.b16 %v921
    %v958 = vunpack.c.l.b16 %v922
    %v959 = vunpack.c.l.b16 %v923
    %v960 = vunpack.c.l.b16 %v924
    %v961 = vunpack.c.l.b16 %v925
    %v962 = vunpack.c.l.b16 %v926
    %v963 = vunpack.c.l.b16 %v927
    %v964 = vunpack.c.l.b16 %v928
    %v965 = vunpack.c.l.b16 %v929
    %v966 = vunpack.c.l.b16 %v930
    %v967 = vunpack.c.l.b16 %v931
    %v968 = vunpack.c.l.b16 %v932
    %v969 = vunpack.c.l.b16 %v933
    %v970 = vunpack.c.l.b16 %v934
    %v971 = vunpack.c.l.b16 %v935
    %v972 = vunpack.c.l.b16 %v936
    %v973 = vpack.c.b16 %v958, %v957
    %v974 = vpack.c.b16 %v960, %v959
    %v975 = vpack.c.b16 %v962, %v961
    %v976 = vpack.c.b16 %v964, %v963
    %v977 = vpack.c.b16 %v966, %v965
    %v978 = vpack.c.b16 %v968, %v967
    %v979 = vpack.c.b16 %v970, %v969
    %v980 = vpack.c.b16 %v972, %v971
    %989 = vmatpush.bf16.msra.mxu0 %v980
    %990 = vmatpush.bf16.msra.mxu0 %v979
    %991 = vmatpush.bf16.msra.mxu0 %v978
    %992 = vmatpush.bf16.msra.mxu0 %v977
    %993 = vmatpush.bf16.msra.mxu0 %v976
    %994 = vmatpush.bf16.msra.mxu0 %v975
    %995 = vmatpush.bf16.msra.mxu0 %v974
    %996 = vmatpush.bf16.msra.mxu0 %v973
    %997 = vmatmul.bf16.gmra.mxu0 %v920
    %v998 = vpop.f32.mrf.mxu0
    %v999 = vadd.f32 %v939, %v998
    %v1000 = vpop.f32.mrf.mxu0
    %1001 = vdwg.mxu0
    %v1002 = vmul.f32 %v999, 0.5
    %v1003 = vtanh.pop %v1002
    %v1004 = vmul.f32 %v1003, 0.5
    %v1005 = vadd.f32 %v1004, 0.5
    %vm1006 = vcmask 64512
    %1007 = vst.msk [vmem:[%s8] sm:$0xff] %vm1006, %v1005
    // Predicated region
    $region50: #{_forward_impl.1} parent=1 // pred_check
      _
    $region51: #{_forward_impl.1} parent=1 // pred_check_branch
      %1009 = sbr.rel (0) target = $region53
    $region52: #{_forward_impl.1} parent=1 // pred_region
      _
    $region53: #{_forward_impl.1} parent=1 // pred_fallthru
      _
    // Predicated region
    $region54: #{_forward_impl.1} parent=1 // pred_check
      _
    $region55: #{_forward_impl.1} parent=1 // pred_check_branch
      %1011 = sbr.rel (0) target = $region57
    $region56: #{_forward_impl.1} parent=1 // pred_region
      _
    $region57: #{_forward_impl.1} parent=1 // pred_fallthru
      _
    %1012 = vsyncpa [#allocation3], 1
    %1013 = vsyncpa [#allocation5], 1
    %1014 = vsyncpa [#allocation8], 1

</llo_original>
